<compile_context>
chip_gen: v7x
topology: tpu7x:2x2x1
jax: 0.10.0
libtpu: 0.0.40
codegen_flags: <defaults>
</compile_context>

<pallas_src>
import jax
import jax.numpy as jnp
from jax.experimental import pallas as pl
from jax.experimental.pallas import tpu as pltpu

KH = KW = 3          # synthetic backbone conv kernel size
OUT_W = 128          # lane-dense packed output slab width


def isic1_kernel(p_ref, wct_ref, bc_ref, seg_ref, wh_ref, bh_ref, out_ref):
    # p_ref  : (Kpad, Lpad) bf16  im2col patches, tb images packed along the lane axis
    # wct_ref: (F, Kpad)    bf16  conv weight, transposed
    # bc_ref : (F, 1)       f32   conv bias
    # seg_ref: (tb, Lpad)   f32   segmented-GAP matrix (1/P on image t's lanes, else 0)
    # wh_ref : (F, OUT_W)   f32   fused head weight  [w1 | w1@w2 | 0 pad]
    # bh_ref : (1, OUT_W)   f32   fused head bias    [b1 | b1@w2+b2 | 0 pad]
    # out_ref: (tb, OUT_W)  f32   sigmoid of fused head logits (packed slab)

    # Single wide conv-as-matmul on the MXU: bf16 inputs, f32 accumulation. (F, Lpad)
    act = jnp.dot(wct_ref[...], p_ref[...], preferred_element_type=jnp.float32)
    act = jnp.maximum(act + bc_ref[...], 0.0)          # bias + ReLU, f32, lane-dense

    # Segmented GAP as a second (tiny) MXU matmul: (tb, Lpad) . (F, Lpad)^T -> (tb, F).
    # seg zeros exclude padded lanes exactly (no mask, no post-sum correction needed).
    feat = jnp.einsum("tl,fl->tf", seg_ref[...], act,
                      preferred_element_type=jnp.float32)

    # Fused heads: cols [0:16) are x1, cols [16:16+NC) are x2 (pre-sigmoid).
    logits = jnp.dot(feat, wh_ref[...], preferred_element_type=jnp.float32) + bh_ref[...]
    out_ref[...] = jax.nn.sigmoid(logits)              # one unmasked lane-dense store


def _round_up(x, m):
    return (x + m - 1) // m * m


def _im2col_kp(x, kh, kw):
    """(B, H, W, C) -> (B, kh*kw*C, Ho*Wo): spatial positions on the last (lane) axis.

    Pure layout plumbing (glue); all hot-path compute runs in the kernel.
    """
    B, H, W, C = x.shape
    Ho, Wo = H - kh + 1, W - kw + 1
    cols = [x[:, dy:dy + Ho, dx:dx + Wo, :] for dy in range(kh) for dx in range(kw)]
    p = jnp.stack(cols, axis=3)                       # (B, Ho, Wo, kh*kw, C)
    p = p.reshape(B, Ho * Wo, kh * kw * C)            # (B, P, K)
    return jnp.transpose(p, (0, 2, 1))                # (B, K, P)


def isic_model1_forward(images_nchw, params, tb=None):
    """images_nchw: (B, Cin, H, W) float32.  Returns (sigmoid(x1), sigmoid(x2))."""
    wconv, bconv, w1, b1, w2, b2 = params
    x = jnp.transpose(images_nchw, (0, 2, 3, 1)).astype(jnp.float32)   # NCHW -> NHWC

    B, H, W, Cin = x.shape
    F = wconv.shape[-1]            # in_features of the synthetic backbone
    C16 = w1.shape[-1]             # 16
    NC = w2.shape[-1]              # num_classes
    assert C16 + NC <= OUT_W

    Ho, Wo = H - KH + 1, W - KW + 1
    P, K = Ho * Wo, KH * KW * Cin
    Kpad = _round_up(K, 8)         # sublane-align the contraction (zero-pad: exact)

    if tb is None:
        # tb up to 64, but always >= 2 grid steps when B >= 2 (v7x has 2 TensorCores).
        tb = max(1, min(64, (B + 1) // 2))
    G = pl.cdiv(B, tb)
    Bpad = G * tb
    L = tb * P
    Lpad = _round_up(L, 128)       # one lane pad per batch tile, not per image

    # Patches: pack tb images along the lane axis -> (G, Kpad, Lpad) bf16.
    patches = _im2col_kp(x, KH, KW)                                    # (B, K, P)
    patches = jnp.pad(patches, ((0, Bpad - B), (0, Kpad - K), (0, 0)))  # (Bpad, Kpad, P)
    patches = patches.reshape(G, tb, Kpad, P).transpose(0, 2, 1, 3).reshape(G, Kpad, L)
    patches = jnp.pad(patches, ((0, 0), (0, 0), (0, Lpad - L))).astype(jnp.bfloat16)

    # Conv weight transposed + K padded; bf16 for MXU, bias stays f32.
    wct = jnp.pad(jnp.transpose(wconv.reshape(K, F)), ((0, 0), (0, Kpad - K)))
    wct = wct.astype(jnp.bfloat16)                                     # (F, Kpad)
    bc = bconv.reshape(F, 1).astype(jnp.float32)

    # Segmented-GAP matrix: seg[t, l] = 1/P iff lane l belongs to image t, else 0.
    # (Constant across grid steps -> DMA'd once; excludes lane padding exactly.)
    lane_img = jnp.arange(Lpad) // P
    seg = (jnp.arange(tb)[:, None] == lane_img[None, :]).astype(jnp.float32) / float(P)

    # Fuse both Linear layers into one lane-dense head slab:
    #   x1 = feat @ w1 + b1 ; x2 = x1 @ w2 + b2 = feat @ (w1 @ w2) + (b1 @ w2 + b2)
    wh = jnp.concatenate([w1, w1 @ w2], axis=1)                        # (F, 16+NC)
    bh = jnp.concatenate([b1, b1 @ w2 + b2]).reshape(1, C16 + NC)
    wh = jnp.pad(wh, ((0, 0), (0, OUT_W - (C16 + NC)))).astype(jnp.float32)
    bh = jnp.pad(bh, ((0, 0), (0, OUT_W - (C16 + NC)))).astype(jnp.float32)

    out = pl.pallas_call(
        isic1_kernel,
        out_shape=jax.ShapeDtypeStruct((G, tb, OUT_W), jnp.float32),
        grid=(G,),
        in_specs=[
            pl.BlockSpec((None, Kpad, Lpad), lambda g: (g, 0, 0)),
            pl.BlockSpec((F, Kpad),          lambda g: (0, 0)),
            pl.BlockSpec((F, 1),             lambda g: (0, 0)),
            pl.BlockSpec((tb, Lpad),         lambda g: (0, 0)),
            pl.BlockSpec((F, OUT_W),         lambda g: (0, 0)),
            pl.BlockSpec((1, OUT_W),         lambda g: (0, 0)),
        ],
        out_specs=pl.BlockSpec((None, tb, OUT_W), lambda g: (g, 0, 0)),
        compiler_params=pltpu.CompilerParams(
            dimension_semantics=("parallel",),
            vmem_limit_bytes=32 * 1024 * 1024,   # safe on v5e/v6e/v7x (<= 48 MiB on v7x)
        ),
    )(patches, wct, bc, seg, wh, bh)

    out = out.reshape(Bpad, OUT_W)[:B]
    return out[:, :C16], out[:, C16:C16 + NC]


def reference_forward(images_nchw, params):
    """Pure-JAX (XLA, f32) reference with identical semantics, for validation."""
    wconv, bconv, w1, b1, w2, b2 = params
    x = jnp.transpose(images_nchw, (0, 2, 3, 1)).astype(jnp.float32)
    B, H, W, Cin = x.shape
    F = wconv.shape[-1]
    Ho, Wo = H - KH + 1, W - KW + 1
    cols = [x[:, dy:dy + Ho, dx:dx + Wo, :] for dy in range(KH) for dx in range(KW)]
    p = jnp.stack(cols, axis=3).reshape(B, Ho * Wo, KH * KW * Cin)
    conv = jnp.maximum(p @ wconv.reshape(-1, F) + bconv, 0.0)
    feat = jnp.mean(conv, axis=1)
    x1 = feat @ w1 + b1
    x2 = x1 @ w2 + b2
    return jax.nn.sigmoid(x1), jax.nn.sigmoid(x2)


def init_params(key, cin=3, in_features=32, num_classes=1):
    """Deterministic synthetic parameters (shapes follow ISICModel1.__init__)."""
    k = jax.random.split(key, 6)
    wconv = 0.1 * jax.random.normal(k[0], (KH, KW, cin, in_features), jnp.float32)
    bconv = 0.1 * jax.random.normal(k[1], (in_features,), jnp.float32)
    # self.model.head = nn.Linear(in_features, 16)
    w1 = 0.1 * jax.random.normal(k[2], (in_features, 16), jnp.float32)
    b1 = 0.1 * jax.random.normal(k[3], (16,), jnp.float32)
    # self.my_head = nn.Linear(16, num_classes)
    w2 = 0.1 * jax.random.normal(k[4], (16, num_classes), jnp.float32)
    b2 = 0.1 * jax.random.normal(k[5], (num_classes,), jnp.float32)
    return wconv, bconv, w1, b1, w2, b2


if __name__ == "__main__":
    key = jax.random.PRNGKey(0)
    k_img, k_par = jax.random.split(key)

    B, Cin, H, W = 2, 3, 16, 16
    images = jax.random.normal(k_img, (B, Cin, H, W), jnp.float32)   # NCHW, like PyTorch
    params = init_params(k_par, cin=Cin, in_features=32, num_classes=1)

    sig_x1, sig_x2 = jax.jit(isic_model1_forward)(images, params)
    jax.block_until_ready((sig_x1, sig_x2))

    ref_x1, ref_x2 = reference_forward(images, params)

    assert sig_x1.shape == (B, 16) and sig_x2.shape == (B, 1)
    assert bool(jnp.all((sig_x1 > 0) & (sig_x1 < 1))) and bool(jnp.all((sig_x2 > 0) & (sig_x2 < 1)))
    assert bool(jnp.allclose(sig_x1, ref_x1, atol=3e-2, rtol=3e-2))
    assert bool(jnp.allclose(sig_x2, ref_x2, atol=3e-2, rtol=3e-2))
    print("KERNEL_OK")
</pallas_src>

<mosaic_0001>
module attributes {stable_mosaic.version = 11 : i64} {
  func.func @isic1_kernel(%arg0: i32, %arg1: memref<1x32x256xbf16, #tpu.memory_space<vmem>>, %arg2: memref<32x32xbf16, #tpu.memory_space<vmem>>, %arg3: memref<32x1xf32, #tpu.memory_space<vmem>>, %arg4: memref<1x256xf32, #tpu.memory_space<vmem>>, %arg5: memref<32x128xf32, #tpu.memory_space<vmem>>, %arg6: memref<1x128xf32, #tpu.memory_space<vmem>>, %arg7: memref<1x1x128xf32, #tpu.memory_space<vmem>>) attributes {dimension_semantics = [#tpu.dimension_semantics<parallel>], iteration_bounds = array<i64: 2>, scalar_prefetch = 0 : i64, scratch_operands = 0 : i64, tpu.core_type = #tpu.core_type<tc>, window_params = [{transform_indices = @transform_0, window_bounds = array<i64: 1, 32, 256>}, {pipeline_mode = #tpu.pipeline_mode<synchronous>, transform_indices = @transform_1, window_bounds = array<i64: 32, 32>}, {pipeline_mode = #tpu.pipeline_mode<synchronous>, transform_indices = @transform_2, window_bounds = array<i64: 32, 1>}, {pipeline_mode = #tpu.pipeline_mode<synchronous>, transform_indices = @transform_3, window_bounds = array<i64: 1, 256>}, {pipeline_mode = #tpu.pipeline_mode<synchronous>, transform_indices = @transform_4, window_bounds = array<i64: 32, 128>}, {pipeline_mode = #tpu.pipeline_mode<synchronous>, transform_indices = @transform_5, window_bounds = array<i64: 1, 128>}, {transform_indices = @transform_6, window_bounds = array<i64: 1, 1, 128>}]} {
    %c0 = arith.constant 0 : index
    %c0_0 = arith.constant 0 : index
    %0 = vector.load %arg2[%c0, %c0_0] : memref<32x32xbf16, #tpu.memory_space<vmem>>, vector<32x32xbf16>
    %c0_1 = arith.constant 0 : index
    %c0_2 = arith.constant 0 : index
    %c0_3 = arith.constant 0 : index
    %1 = vector.load %arg1[%c0_1, %c0_2, %c0_3] : memref<1x32x256xbf16, #tpu.memory_space<vmem>>, vector<1x32x256xbf16>
    %2 = vector.shape_cast %1 : vector<1x32x256xbf16> to vector<32x256xbf16>
    %cst = arith.constant dense<0.000000e+00> : vector<32x256xf32>
    %3 = tpu.matmul %0, %2, %cst {dimension_numbers = #tpu.dot_dimension_numbers<[1], [0], [0], [1], [0, 0, 1, 1], [], []>} : vector<32x32xbf16>, vector<32x256xbf16>, vector<32x256xf32> -> vector<32x256xf32>
    %c0_4 = arith.constant 0 : index
    %c0_5 = arith.constant 0 : index
    %4 = vector.load %arg3[%c0_4, %c0_5] : memref<32x1xf32, #tpu.memory_space<vmem>>, vector<32x1xf32>
    %5 = vector.broadcast %4 : vector<32x1xf32> to vector<32x256xf32>
    %6 = arith.addf %3, %5 : vector<32x256xf32>
    %cst_6 = arith.constant 0.000000e+00 : f32
    %7 = vector.broadcast %cst_6 : f32 to vector<32x256xf32>
    %8 = arith.maximumf %6, %7 : vector<32x256xf32>
    %c0_7 = arith.constant 0 : index
    %c0_8 = arith.constant 0 : index
    %9 = vector.load %arg4[%c0_7, %c0_8] : memref<1x256xf32, #tpu.memory_space<vmem>>, vector<1x256xf32>
    "tpu.trace_start"() <{level = 10 : i32, message = "tl,fl->tf"}> : () -> ()
    %cst_9 = arith.constant dense<0.000000e+00> : vector<1x32xf32>
    %10 = tpu.matmul %9, %8, %cst_9 {dimension_numbers = #tpu.dot_dimension_numbers<[1], [1], [0], [0], [0, 0, 1, 0], [], []>} : vector<1x256xf32>, vector<32x256xf32>, vector<1x32xf32> -> vector<1x32xf32>
    "tpu.trace_stop"() : () -> ()
    %c0_10 = arith.constant 0 : index
    %c0_11 = arith.constant 0 : index
    %11 = vector.load %arg5[%c0_10, %c0_11] : memref<32x128xf32, #tpu.memory_space<vmem>>, vector<32x128xf32>
    %cst_12 = arith.constant dense<0.000000e+00> : vector<1x128xf32>
    %12 = tpu.matmul %10, %11, %cst_12 {dimension_numbers = #tpu.dot_dimension_numbers<[1], [0], [0], [1], [0, 0, 1, 1], [], []>} : vector<1x32xf32>, vector<32x128xf32>, vector<1x128xf32> -> vector<1x128xf32>
    %c0_13 = arith.constant 0 : index
    %c0_14 = arith.constant 0 : index
    %13 = vector.load %arg6[%c0_13, %c0_14] : memref<1x128xf32, #tpu.memory_space<vmem>>, vector<1x128xf32>
    %14 = arith.addf %12, %13 : vector<1x128xf32>
    %15 = arith.negf %14 : vector<1x128xf32>
    %16 = math.exp %15 : vector<1x128xf32>
    %cst_15 = arith.constant 1.000000e+00 : f32
    %17 = vector.broadcast %cst_15 : f32 to vector<1x128xf32>
    %18 = arith.addf %17, %16 : vector<1x128xf32>
    %19 = arith.divf %17, %18 : vector<1x128xf32>
    %c0_16 = arith.constant 0 : index
    %c0_17 = arith.constant 0 : index
    %c0_18 = arith.constant 0 : index
    %20 = vector.load %arg7[%c0_16, %c0_17, %c0_18] : memref<1x1x128xf32, #tpu.memory_space<vmem>>, vector<1x1x128xf32>
    %21 = vector.shape_cast %20 : vector<1x1x128xf32> to vector<1x128xf32>
    %22 = vector.shape_cast %19 : vector<1x128xf32> to vector<1x1x128xf32>
    tpu.vector_store %arg7[%c0_16, %c0_17, %c0_18], %22 {strides = array<i32>} : memref<1x1x128xf32, #tpu.memory_space<vmem>>, vector<1x1x128xf32>,
    return
  }
  func.func @transform_0(%arg0: i32) -> (i32, i32, i32) {
    %c0_i32 = arith.constant 0 : i32
    %c0_i32_0 = arith.constant 0 : i32
    %c0_i32_1 = arith.constant 0 : i32
    return %arg0, %c0_i32, %c0_i32_0 : i32, i32, i32
  }
  func.func @transform_1(%arg0: i32) -> (i32, i32) {
    %c0_i32 = arith.constant 0 : i32
    %c0_i32_0 = arith.constant 0 : i32
    %c0_i32_1 = arith.constant 0 : i32
    return %c0_i32, %c0_i32_0 : i32, i32
  }
  func.func @transform_2(%arg0: i32) -> (i32, i32) {
    %c0_i32 = arith.constant 0 : i32
    %c0_i32_0 = arith.constant 0 : i32
    %c0_i32_1 = arith.constant 0 : i32
    return %c0_i32, %c0_i32_0 : i32, i32
  }
  func.func @transform_3(%arg0: i32) -> (i32, i32) {
    %c0_i32 = arith.constant 0 : i32
    %c0_i32_0 = arith.constant 0 : i32
    %c0_i32_1 = arith.constant 0 : i32
    return %c0_i32, %c0_i32_0 : i32, i32
  }
  func.func @transform_4(%arg0: i32) -> (i32, i32) {
    %c0_i32 = arith.constant 0 : i32
    %c0_i32_0 = arith.constant 0 : i32
    %c0_i32_1 = arith.constant 0 : i32
    return %c0_i32, %c0_i32_0 : i32, i32
  }
  func.func @transform_5(%arg0: i32) -> (i32, i32) {
    %c0_i32 = arith.constant 0 : i32
    %c0_i32_0 = arith.constant 0 : i32
    %c0_i32_1 = arith.constant 0 : i32
    return %c0_i32, %c0_i32_0 : i32, i32
  }
  func.func @transform_6(%arg0: i32) -> (i32, i32, i32) {
    %c0_i32 = arith.constant 0 : i32
    %c0_i32_0 = arith.constant 0 : i32
    %c0_i32_1 = arith.constant 0 : i32
    return %arg0, %c0_i32, %c0_i32_0 : i32, i32, i32
  }
}

</mosaic_0001>

<llo_original>
// kernel: isic_model1_forward.1
$region0: #{isic_model1_forward.1}
  #allocation0 [shape = 'u32[]', space=smem, size = 0x4, offset = 0x4, fixed_abs, tag = 'smem constant byte address 0x4 - core index']
  #allocation1 [shape = 'u32[144,128]{1,0:T(1,128)}', space=vmem, size = 0x12000, scoped, tag = 'internal scratch']
  %s0 = inlined_call_operand.vmem [shape: bf16[2,32,256], index: 0, kind: input, shape index: {}]
  %s1 = inlined_call_operand.vmem [shape: bf16[32,32], index: 1, kind: input, shape index: {}]
  %s2 = inlined_call_operand.vmem [shape: f32[32,1], index: 2, kind: input, shape index: {}]
  %s3 = inlined_call_operand.vmem [shape: f32[1,256], index: 3, kind: input, shape index: {}]
  %s4 = inlined_call_operand.vmem [shape: f32[32,128], index: 4, kind: input, shape index: {}]
  %s5 = inlined_call_operand.vmem [shape: f32[1,128], index: 5, kind: input, shape index: {}]
  %s6 = inlined_call_operand.vmem [shape: f32[2,1,128], index: 6, kind: output, shape index: {}]
  %s7 = sld [smem:[#allocation0]]
  $region57: #{isic_model1_forward.1} parent=0
    _
  %s9 = ssub.s32 1, %s7
  %s10 = scalar_select 0, %s9, %s7
  loop: start=0, step=1, limit=4
  $region2: #{isic_model1_forward.1} parent=0 // loop_pre_header
    _
  $region3: #{isic_model1_forward.1} parent=0 // loop_header
    %s12 = sphi 0, %s16
    %p13 = scmp.ge.s32.totalorder %s12, 4
    %s22 = sphi 0, %s24
    %s25 = sphi 0, %s22
    %s26 = sphi 0, %s25
    %s42 = sphi 0, %s26
    %s46 = sphi 0, %s46
    %s48 = sphi 0, %s46
    %s49 = sphi 0, %s48
    %s63 = sphi 0, %s49
    %s67 = sphi 0, %s67
    %s69 = sphi 0, %s67
    %s70 = sphi 0, %s69
    %s84 = sphi 0, %s70
    %s88 = sphi 0, %s88
    %s90 = sphi 0, %s88
    %s91 = sphi 0, %s90
    %s105 = sphi 0, %s91
    %s109 = sphi 0, %s109
    %s111 = sphi 0, %s109
    %s112 = sphi 0, %s111
    %s126 = sphi 0, %s112
    %s130 = sphi 0, %s130
    %s132 = sphi 0, %s130
    %s133 = sphi 0, %s132
    %s147 = sphi 0, %s133
    %s153 = sphi 0, %s155
    %s156 = sphi 0, %s153
    %s157 = sphi 0, %s156
    %s173 = sphi 0, %s157
  $region4: #{isic_model1_forward.1} parent=0 // loop_header_branch
    %15 = sbr.rel (%p13) target = $region8
  $region5: #{isic_model1_forward.1} parent=0 // loop_body
    %s17 = ssub.s32 %s12, 1
    %s18 = ssub.s32 %s12, 2
    %s19 = sadd.s32 %s12, 1
    %s20 = ssub.s32 %s12, %s19
    %p21 = scmp.eq.s32.totalorder %s20, 0
    %s23 = sadd.s32 %s22, 1
    %s24 = scalar_select %p21, %s22, %s23
    %p27 = pneg %p21
    %p28 = scmp.eq.s32.totalorder %s12, 1
    %p29 = por %p27, %p28
    %p30 = scmp.ne.s32.totalorder %s22, %s25
    %p31 = scmp.eq.s32.totalorder %s12, 0
    %p32 = por %p30, %p31
    %p33 = scmp.ne.s32.totalorder %s22, %s25
    %p34 = scmp.eq.s32.totalorder %s17, 1
    %p35 = por %p33, %p34
    %p36 = scmp.ne.s32.totalorder %s25, %s26
    %p37 = scmp.eq.s32.totalorder %s17, 0
    %p38 = por %p36, %p37
    %p39 = scmp.ne.s32.totalorder %s25, %s26
    %p40 = scmp.eq.s32.totalorder %s18, 1
    %p41 = por %p39, %p40
    %p43 = scmp.ne.s32.totalorder %s26, %s42
    %p44 = scmp.eq.s32.totalorder %s18, 0
    %p45 = por %p43, %p44
    %s47 = sadd.s32 %s46, 1
    %p50 = scmp.eq.s32.totalorder %s12, 1
    %p51 = scmp.ne.s32.totalorder %s46, %s48
    %p52 = scmp.eq.s32.totalorder %s12, 0
    %p53 = por %p51, %p52
    %p54 = scmp.ne.s32.totalorder %s46, %s48
    %p55 = scmp.eq.s32.totalorder %s17, 1
    %p56 = por %p54, %p55
    %p57 = scmp.ne.s32.totalorder %s48, %s49
    %p58 = scmp.eq.s32.totalorder %s17, 0
    %p59 = por %p57, %p58
    %p60 = scmp.ne.s32.totalorder %s48, %s49
    %p61 = scmp.eq.s32.totalorder %s18, 1
    %p62 = por %p60, %p61
    %p64 = scmp.ne.s32.totalorder %s49, %s63
    %p65 = scmp.eq.s32.totalorder %s18, 0
    %p66 = por %p64, %p65
    %s68 = sadd.s32 %s67, 1
    %p71 = scmp.eq.s32.totalorder %s12, 1
    %p72 = scmp.ne.s32.totalorder %s67, %s69
    %p73 = scmp.eq.s32.totalorder %s12, 0
    %p74 = por %p72, %p73
    %p75 = scmp.ne.s32.totalorder %s67, %s69
    %p76 = scmp.eq.s32.totalorder %s17, 1
    %p77 = por %p75, %p76
    %p78 = scmp.ne.s32.totalorder %s69, %s70
    %p79 = scmp.eq.s32.totalorder %s17, 0
    %p80 = por %p78, %p79
    %p81 = scmp.ne.s32.totalorder %s69, %s70
    %p82 = scmp.eq.s32.totalorder %s18, 1
    %p83 = por %p81, %p82
    %p85 = scmp.ne.s32.totalorder %s70, %s84
    %p86 = scmp.eq.s32.totalorder %s18, 0
    %p87 = por %p85, %p86
    %s89 = sadd.s32 %s88, 1
    %p92 = scmp.eq.s32.totalorder %s12, 1
    %p93 = scmp.ne.s32.totalorder %s88, %s90
    %p94 = scmp.eq.s32.totalorder %s12, 0
    %p95 = por %p93, %p94
    %p96 = scmp.ne.s32.totalorder %s88, %s90
    %p97 = scmp.eq.s32.totalorder %s17, 1
    %p98 = por %p96, %p97
    %p99 = scmp.ne.s32.totalorder %s90, %s91
    %p100 = scmp.eq.s32.totalorder %s17, 0
    %p101 = por %p99, %p100
    %p102 = scmp.ne.s32.totalorder %s90, %s91
    %p103 = scmp.eq.s32.totalorder %s18, 1
    %p104 = por %p102, %p103
    %p106 = scmp.ne.s32.totalorder %s91, %s105
    %p107 = scmp.eq.s32.totalorder %s18, 0
    %p108 = por %p106, %p107
    %s110 = sadd.s32 %s109, 1
    %p113 = scmp.eq.s32.totalorder %s12, 1
    %p114 = scmp.ne.s32.totalorder %s109, %s111
    %p115 = scmp.eq.s32.totalorder %s12, 0
    %p116 = por %p114, %p115
    %p117 = scmp.ne.s32.totalorder %s109, %s111
    %p118 = scmp.eq.s32.totalorder %s17, 1
    %p119 = por %p117, %p118
    %p120 = scmp.ne.s32.totalorder %s111, %s112
    %p121 = scmp.eq.s32.totalorder %s17, 0
    %p122 = por %p120, %p121
    %p123 = scmp.ne.s32.totalorder %s111, %s112
    %p124 = scmp.eq.s32.totalorder %s18, 1
    %p125 = por %p123, %p124
    %p127 = scmp.ne.s32.totalorder %s112, %s126
    %p128 = scmp.eq.s32.totalorder %s18, 0
    %p129 = por %p127, %p128
    %s131 = sadd.s32 %s130, 1
    %p134 = scmp.eq.s32.totalorder %s12, 1
    %p135 = scmp.ne.s32.totalorder %s130, %s132
    %p136 = scmp.eq.s32.totalorder %s12, 0
    %p137 = por %p135, %p136
    %p138 = scmp.ne.s32.totalorder %s130, %s132
    %p139 = scmp.eq.s32.totalorder %s17, 1
    %p140 = por %p138, %p139
    %p141 = scmp.ne.s32.totalorder %s132, %s133
    %p142 = scmp.eq.s32.totalorder %s17, 0
    %p143 = por %p141, %p142
    %p144 = scmp.ne.s32.totalorder %s132, %s133
    %p145 = scmp.eq.s32.totalorder %s18, 1
    %p146 = por %p144, %p145
    %p148 = scmp.ne.s32.totalorder %s133, %s147
    %p149 = scmp.eq.s32.totalorder %s18, 0
    %p150 = por %p148, %p149
    %s151 = ssub.s32 %s12, %s19
    %p152 = scmp.eq.s32.totalorder %s151, 0
    %s154 = sadd.s32 %s153, 1
    %s155 = scalar_select %p152, %s153, %s154
    %p158 = pneg %p152
    %p159 = scmp.eq.s32.totalorder %s12, 1
    %p160 = por %p158, %p159
    %p161 = scmp.ne.s32.totalorder %s153, %s156
    %p162 = scmp.eq.s32.totalorder %s12, 0
    %p163 = por %p161, %p162
    %p164 = scmp.ne.s32.totalorder %s153, %s156
    %p165 = scmp.eq.s32.totalorder %s17, 1
    %p166 = por %p164, %p165
    %p167 = scmp.ne.s32.totalorder %s156, %s157
    %p168 = scmp.eq.s32.totalorder %s17, 0
    %p169 = por %p167, %p168
    %p170 = scmp.ne.s32.totalorder %s156, %s157
    %p171 = scmp.eq.s32.totalorder %s18, 1
    %p172 = por %p170, %p171
    %p174 = scmp.ne.s32.totalorder %s157, %s173
    %p175 = scmp.eq.s32.totalorder %s18, 0
    %p176 = por %p174, %p175
    %p177 = scmp.le.s32.totalorder 1, %s12
    %p178 = scmp.lt.s32.totalorder %s12, 3
    %p179 = pnand %p177, %p178
    %p180 = pneg %p179
    // Predicated region
    $region9: #{isic_model1_forward.1} parent=5 // pred_check
      _
    $region10: #{isic_model1_forward.1} parent=5 // pred_check_branch
      %182 = sbr.rel (%p179) target = $region12
    $region11: #{isic_model1_forward.1} parent=5 // pred_region
      %s183 = ssub.s32 %s12, 1
      // Predicated region
      $region13: #{isic_model1_forward.1} parent=11 // pred_check
        %p184 = pneg %p59
      $region14: #{isic_model1_forward.1} parent=11 // pred_check_branch
        %186 = sbr.rel (%p184) target = $region16
      $region15: #{isic_model1_forward.1} parent=11 // pred_region
        _
      $region16: #{isic_model1_forward.1} parent=11 // pred_fallthru
        _
      // Predicated region
      $region17: #{isic_model1_forward.1} parent=11 // pred_check
        %p187 = pneg %p80
      $region18: #{isic_model1_forward.1} parent=11 // pred_check_branch
        %189 = sbr.rel (%p187) target = $region20
      $region19: #{isic_model1_forward.1} parent=11 // pred_region
        _
      $region20: #{isic_model1_forward.1} parent=11 // pred_fallthru
        _
      // Predicated region
      $region21: #{isic_model1_forward.1} parent=11 // pred_check
        %p190 = pneg %p101
      $region22: #{isic_model1_forward.1} parent=11 // pred_check_branch
        %192 = sbr.rel (%p190) target = $region24
      $region23: #{isic_model1_forward.1} parent=11 // pred_region
        _
      $region24: #{isic_model1_forward.1} parent=11 // pred_fallthru
        _
      // Predicated region
      $region25: #{isic_model1_forward.1} parent=11 // pred_check
        %p193 = pneg %p122
      $region26: #{isic_model1_forward.1} parent=11 // pred_check_branch
        %195 = sbr.rel (%p193) target = $region28
      $region27: #{isic_model1_forward.1} parent=11 // pred_region
        _
      $region28: #{isic_model1_forward.1} parent=11 // pred_fallthru
        _
      // Predicated region
      $region29: #{isic_model1_forward.1} parent=11 // pred_check
        %p196 = pneg %p143
      $region30: #{isic_model1_forward.1} parent=11 // pred_check_branch
        %198 = sbr.rel (%p196) target = $region32
      $region31: #{isic_model1_forward.1} parent=11 // pred_region
        _
      $region32: #{isic_model1_forward.1} parent=11 // pred_fallthru
        _
    $region12: #{isic_model1_forward.1} parent=5 // pred_fallthru
      _
    %p199 = scmp.lt.s32.totalorder %s12, 2
    // Predicated region
    $region33: #{isic_model1_forward.1} parent=5 // pred_check
      %p200 = pneg %p199
    $region34: #{isic_model1_forward.1} parent=5 // pred_check_branch
      %202 = sbr.rel (%p200) target = $region36
    $region35: #{isic_model1_forward.1} parent=5 // pred_region
      // Predicated region
      $region37: #{isic_model1_forward.1} parent=35 // pred_check
        %p203 = pneg %p32
      $region38: #{isic_model1_forward.1} parent=35 // pred_check_branch
        %205 = sbr.rel (%p203) target = $region40
      $region39: #{isic_model1_forward.1} parent=35 // pred_region
        %p206 = scmp.lt.s32.totalorder %s12, 1
        %s207 = scalar_select %p206, %s12, 1
        %s208 = smul.addr %s207, 8
        %s209 = smul.addr %s208, 4
        %s210 = scalar_lea.vmem %s0, %s209
      $region40: #{isic_model1_forward.1} parent=35 // pred_fallthru
        _
    $region36: #{isic_model1_forward.1} parent=5 // pred_fallthru
      _
    %p211 = scmp.le.s32.totalorder 1, %s12
    %p212 = scmp.lt.s32.totalorder %s12, 3
    %p213 = pnand %p211, %p212
    %p214 = pneg %p213
    // Predicated region
    $region41: #{isic_model1_forward.1} parent=5 // pred_check
      _
    $region42: #{isic_model1_forward.1} parent=5 // pred_check_branch
      %216 = sbr.rel (%p213) target = $region44
    $region43: #{isic_model1_forward.1} parent=5 // pred_region
      %s217 = ssub.s32 %s12, 1
      %p218 = scmp.lt.s32.totalorder %s17, 1
      %s219 = scalar_select %p218, %s17, 1
      %s220 = smul.addr %s219, 8
      %s221 = smul.addr %s220, 4
      %s222 = scalar_lea.vmem %s0, %s221
      %p223 = pneg %p38
      %p224 = pneg %p35
      %p225 = pneg %p59
      %p226 = pneg %p56
      %p227 = pneg %p80
      %p228 = pneg %p77
      %p229 = pneg %p101
      %p230 = pneg %p98
      %p231 = pneg %p122
      %p232 = pneg %p119
      %p233 = pneg %p143
      %p234 = pneg %p140
      %p235 = pneg %p169
      %p236 = pneg %p166
      %p237 = scmp.lt.s32.totalorder %s17, 1
      %s238 = scalar_select %p237, %s17, 1
      %s239 = scalar_lea.vmem %s6, %s238
      %p240 = scmp.lt.s32.totalorder %s17, 1
      %s241 = scalar_select %p240, %s17, 1
      %s242 = smul.addr %s241, 8
      %s243 = smul.addr %s242, 4
      %s244 = scalar_lea.vmem %s0, %s243
      %p245 = scmp.lt.s32.totalorder %s17, 1
      %s246 = scalar_select %p245, %s17, 1
      %s247 = scalar_lea.vmem %s6, %s246
      %v249 = vld [vmem:[%s1] sm:$0xf]
      %v250 = vld [vmem:[%s1 + $0x4] sm:$0xf]
      %v251 = vld [vmem:[%s1 + $0x8] sm:$0xf]
      %v252 = vld [vmem:[%s1 + $0xc] sm:$0xf]
      %v253 = vld [vmem:[%s244] sm:$0xff]
      %v254 = vld [vmem:[%s244 + $0x8] sm:$0xff]
      %v255 = vld [vmem:[%s244 + $0x10] sm:$0xff]
      %v256 = vld [vmem:[%s244 + $0x18] sm:$0xff]
      %v257 = vld [vmem:[%s2] sm:$0xff]
      %v258 = vld [vmem:[%s2 + $0x8] sm:$0xff]
      %v259 = vld [vmem:[%s2 + $0x10] sm:$0xff]
      %v260 = vld [vmem:[%s2 + $0x18] sm:$0xff]
      %262 = vset.pattern.permute.xlu0 0
      %263 = vperm.xlu0 %262, %v257
      %v264 = vpop.permute.xlu0 %263
      %267 = vset.pattern.permute.xlu0 0
      %268 = vperm.xlu0 %267, %v258
      %v269 = vpop.permute.xlu0 %268
      %272 = vset.pattern.permute.xlu0 0
      %273 = vperm.xlu0 %272, %v259
      %v274 = vpop.permute.xlu0 %273
      %277 = vset.pattern.permute.xlu0 0
      %278 = vperm.xlu0 %277, %v260
      %v279 = vpop.permute.xlu0 %278
      %v285 = vunpack.c.l.b16 %v249
      %v286 = vunpack.c.l.b16 %v250
      %v287 = vunpack.c.l.b16 %v251
      %v288 = vunpack.c.l.b16 %v252
      %v289 = vpack.c.b16 %v286, %v285
      %v290 = vpack.c.b16 %v288, %v287
      %v295 = vunpack.c.l.b16 %v253
      %v296 = vunpack.c.h.b16 %v253
      %v297 = vunpack.c.l.b16 %v254
      %v298 = vunpack.c.h.b16 %v254
      %v299 = vunpack.c.l.b16 %v255
      %v300 = vunpack.c.h.b16 %v255
      %v301 = vunpack.c.l.b16 %v256
      %v302 = vunpack.c.h.b16 %v256
      %v303 = vpack.c.b16 %v297, %v295
      %v304 = vpack.c.b16 %v298, %v296
      %v305 = vpack.c.b16 %v301, %v299
      %v306 = vpack.c.b16 %v302, %v300
      %vm311 = vcmask 261120
      %v313 = vsel %vm311, %v289, 0
      %v316 = vsel %vm311, %v290, 0
      %318 = vmatprep.subr.bf16.mxu0 %v304
      %319 = vmatpush1.bf16.msra.mxu0 %v303
      %320 = vmatprep.subr.bf16.mxu0 %v306
      %321 = vmatpush1.bf16.msra.mxu0 %v305
      %322 = vmatprep.subr.bf16.mxu0 0
      %323 = vmatpush1.bf16.msra.mxu0 0
      %324 = vmatprep.subr.bf16.mxu0 0
      %325 = vmatpush1.bf16.msra.mxu0 0
      %326 = vmatprep.subr.bf16.mxu0 0
      %327 = vmatpush1.bf16.msra.mxu0 0
      %328 = vmatprep.subr.bf16.mxu0 0
      %329 = vmatpush1.bf16.msra.mxu0 0
      %330 = vmatprep.subr.bf16.mxu0 0
      %331 = vmatpush1.bf16.msra.mxu0 0
      %332 = vmatprep.subr.bf16.mxu0 0
      %333 = vmatpush1.bf16.msra.mxu0 0
      %334 = vmatprep.subr.bf16.mxu0 0
      %335 = vmatpush1.bf16.msra.mxu0 0
      %336 = vmatprep.subr.bf16.mxu0 0
      %337 = vmatpush1.bf16.msra.mxu0 0
      %338 = vmatprep.subr.bf16.mxu0 0
      %339 = vmatpush1.bf16.msra.mxu0 0
      %340 = vmatprep.subr.bf16.mxu0 0
      %341 = vmatpush1.bf16.msra.mxu0 0
      %342 = vmatprep.subr.bf16.mxu0 0
      %343 = vmatpush1.bf16.msra.mxu0 0
      %344 = vmatprep.subr.bf16.mxu0 0
      %345 = vmatpush1.bf16.msra.mxu0 0
      %346 = vmatprep.subr.bf16.mxu0 0
      %347 = vmatpush1.bf16.msra.mxu0 0
      %348 = vmatprep.subr.bf16.mxu0 0
      %349 = vmatpush1.bf16.msra.mxu0 0
      %350 = vmatprep.mubr.bf16.mxu0 0
      %351 = vmatmul.mubr.bf16.gmra.mrb[0].mxu0 %v313
      %v352 = vpop.f32.mrb[0].mxu0
      %v353 = vadd.f32 %v264, %v352
      %v354 = vpop.f32.mrb[0].mxu0
      %v355 = vadd.f32 %v264, %v354
      %v356 = vpop.f32.mrb[0].mxu0
      %v357 = vadd.f32 %v269, %v356
      %v358 = vpop.f32.mrb[0].mxu0
      %v359 = vadd.f32 %v269, %v358
      %360 = vmatprep.mubr.bf16.mxu0 0
      %361 = vmatmul.mubr.bf16.gmra.mrb[0].mxu0 %v316
      %v362 = vpop.f32.mrb[0].mxu0
      %v363 = vadd.f32 %v274, %v362
      %v364 = vpop.f32.mrb[0].mxu0
      %v365 = vadd.f32 %v274, %v364
      %v366 = vpop.f32.mrb[0].mxu0
      %v367 = vadd.f32 %v279, %v366
      %v368 = vpop.f32.mrb[0].mxu0
      %v369 = vadd.f32 %v279, %v368
      %370 = vdwg.mxu0
      %v371 = vmax.f32 %v353, 0.0
      %v372 = vmax.f32 %v355, 0.0
      %v373 = vmax.f32 %v357, 0.0
      %v374 = vmax.f32 %v359, 0.0
      %v375 = vmax.f32 %v363, 0.0
      %v376 = vmax.f32 %v365, 0.0
      %v377 = vmax.f32 %v367, 0.0
      %v378 = vmax.f32 %v369, 0.0
      %v379 = vld [vmem:[%s3] sm:$0x3]
      %v381 = vlaneseq
      %v382 = vshrl.u32 %v381, 7
      %v383 = vsub.s32 0, %v382
      %v384 = vrot.slane %v379, %v383
      %v385 = vlaneseq
      %v386 = vshrl.u32 %v385, 7
      %v387 = vsub.s32 1, %v386
      %v388 = vrot.slane %v379, %v387
      %391 = vmatprep.subr.mxu0 %v372
      %392 = vmatpush1.xpose.msra.mxu0 %v371
      %393 = vmatprep.subr.mxu0 %v374
      %394 = vmatpush1.xpose.msra.mxu0 %v373
      %395 = vmatprep.subr.mxu0 %v376
      %396 = vmatpush1.xpose.msra.mxu0 %v375
      %397 = vmatprep.subr.mxu0 %v378
      %398 = vmatpush1.xpose.msra.mxu0 %v377
      %399 = vmatprep.subr.mxu0 0.0
      %400 = vmatpush1.xpose.msra.mxu0 0.0
      %401 = vmatprep.subr.mxu0 0.0
      %402 = vmatpush1.xpose.msra.mxu0 0.0
      %403 = vmatprep.subr.mxu0 0.0
      %404 = vmatpush1.xpose.msra.mxu0 0.0
      %405 = vmatprep.subr.mxu0 0.0
      %406 = vmatpush1.xpose.msra.mxu0 0.0
      %407 = vmatprep.subr.mxu0 0.0
      %408 = vmatpush1.xpose.msra.mxu0 0.0
      %409 = vmatprep.subr.mxu0 0.0
      %410 = vmatpush1.xpose.msra.mxu0 0.0
      %411 = vmatprep.subr.mxu0 0.0
      %412 = vmatpush1.xpose.msra.mxu0 0.0
      %413 = vmatprep.subr.mxu0 0.0
      %414 = vmatpush1.xpose.msra.mxu0 0.0
      %415 = vmatprep.subr.mxu0 0.0
      %416 = vmatpush1.xpose.msra.mxu0 0.0
      %417 = vmatprep.subr.mxu0 0.0
      %418 = vmatpush1.xpose.msra.mxu0 0.0
      %419 = vmatprep.subr.mxu0 0.0
      %420 = vmatpush1.xpose.msra.mxu0 0.0
      %421 = vmatprep.subr.mxu0 0.0
      %422 = vmatpush1.xpose.msra.mxu0 0.0
      %423 = vmatprep.subr.mxu0 0.0
      %424 = vmatpush1.xpose.msra.mxu0 0.0
      %425 = vmatprep.subr.mxu0 0.0
      %426 = vmatpush1.xpose.msra.mxu0 0.0
      %427 = vmatprep.subr.mxu0 0.0
      %428 = vmatpush1.xpose.msra.mxu0 0.0
      %429 = vmatprep.subr.mxu0 0.0
      %430 = vmatpush1.xpose.msra.mxu0 0.0
      %431 = vmatprep.subr.mxu0 0.0
      %432 = vmatpush1.xpose.msra.mxu0 0.0
      %433 = vmatprep.subr.mxu0 0.0
      %434 = vmatpush1.xpose.msra.mxu0 0.0
      %435 = vmatprep.subr.mxu0 0.0
      %436 = vmatpush1.xpose.msra.mxu0 0.0
      %437 = vmatprep.subr.mxu0 0.0
      %438 = vmatpush1.xpose.msra.mxu0 0.0
      %439 = vmatprep.subr.mxu0 0.0
      %440 = vmatpush1.xpose.msra.mxu0 0.0
      %441 = vmatprep.subr.mxu0 0.0
      %442 = vmatpush1.xpose.msra.mxu0 0.0
      %443 = vmatprep.subr.mxu0 0.0
      %444 = vmatpush1.xpose.msra.mxu0 0.0
      %445 = vmatprep.subr.mxu0 0.0
      %446 = vmatpush1.xpose.msra.mxu0 0.0
      %447 = vmatprep.subr.mxu0 0.0
      %448 = vmatpush1.xpose.msra.mxu0 0.0
      %449 = vmatprep.subr.mxu0 0.0
      %450 = vmatpush1.xpose.msra.mxu0 0.0
      %451 = vmatprep.subr.mxu0 0.0
      %452 = vmatpush1.xpose.msra.mxu0 0.0
      %453 = vmatprep.subr.mxu0 0.0
      %454 = vmatpush1.xpose.msra.mxu0 0.0
      %455 = vmatprep.mubr.f32.mxu0 %v388
      %456 = vmatmul.mubr.f32.gmra.mrb[0].mxu0 %v384
      %v457 = vpop.f32.mrb[0].mxu0
      %v458 = vadd.f32 0.0, %v457
      %v459 = vpop.f32.mrb[0].mxu0
      %460 = vdwg.mxu0
      %v461 = vld [vmem:[%s4] sm:$0xff]
      %v462 = vld [vmem:[%s4 + $0x8] sm:$0xff]
      %v463 = vld [vmem:[%s4 + $0x10] sm:$0xff]
      %v464 = vld [vmem:[%s4 + $0x18] sm:$0xff]
      %v465 = vld [vmem:[%s5] sm:$0x1]
      %v467 = vsel %vm311, %v458, 0
      %469 = vmatprep.subr.mxu0 0.0
      %470 = vmatpush1.msra.mxu0 %v461
      %471 = vmatprep.subr.mxu0 0.0
      %472 = vmatpush1.msra.mxu0 %v462
      %473 = vmatprep.subr.mxu0 0.0
      %474 = vmatpush1.msra.mxu0 %v463
      %475 = vmatprep.subr.mxu0 0.0
      %476 = vmatpush1.msra.mxu0 %v464
      %477 = vmatprep.subr.mxu0 0.0
      %478 = vmatpush1.msra.mxu0 0.0
      %479 = vmatprep.subr.mxu0 0.0
      %480 = vmatpush1.msra.mxu0 0.0
      %481 = vmatprep.subr.mxu0 0.0
      %482 = vmatpush1.msra.mxu0 0.0
      %483 = vmatprep.subr.mxu0 0.0
      %484 = vmatpush1.msra.mxu0 0.0
      %485 = vmatprep.subr.mxu0 0.0
      %486 = vmatpush1.msra.mxu0 0.0
      %487 = vmatprep.subr.mxu0 0.0
      %488 = vmatpush1.msra.mxu0 0.0
      %489 = vmatprep.subr.mxu0 0.0
      %490 = vmatpush1.msra.mxu0 0.0
      %491 = vmatprep.subr.mxu0 0.0
      %492 = vmatpush1.msra.mxu0 0.0
      %493 = vmatprep.subr.mxu0 0.0
      %494 = vmatpush1.msra.mxu0 0.0
      %495 = vmatprep.subr.mxu0 0.0
      %496 = vmatpush1.msra.mxu0 0.0
      %497 = vmatprep.subr.mxu0 0.0
      %498 = vmatpush1.msra.mxu0 0.0
      %499 = vmatprep.subr.mxu0 0.0
      %500 = vmatpush1.msra.mxu0 0.0
      %501 = vmatprep.subr.mxu0 0.0
      %502 = vmatpush1.msra.mxu0 0.0
      %503 = vmatprep.subr.mxu0 0.0
      %504 = vmatpush1.msra.mxu0 0.0
      %505 = vmatprep.subr.mxu0 0.0
      %506 = vmatpush1.msra.mxu0 0.0
      %507 = vmatprep.subr.mxu0 0.0
      %508 = vmatpush1.msra.mxu0 0.0
      %509 = vmatprep.subr.mxu0 0.0
      %510 = vmatpush1.msra.mxu0 0.0
      %511 = vmatprep.subr.mxu0 0.0
      %512 = vmatpush1.msra.mxu0 0.0
      %513 = vmatprep.subr.mxu0 0.0
      %514 = vmatpush1.msra.mxu0 0.0
      %515 = vmatprep.subr.mxu0 0.0
      %516 = vmatpush1.msra.mxu0 0.0
      %517 = vmatprep.subr.mxu0 0.0
      %518 = vmatpush1.msra.mxu0 0.0
      %519 = vmatprep.subr.mxu0 0.0
      %520 = vmatpush1.msra.mxu0 0.0
      %521 = vmatprep.subr.mxu0 0.0
      %522 = vmatpush1.msra.mxu0 0.0
      %523 = vmatprep.subr.mxu0 0.0
      %524 = vmatpush1.msra.mxu0 0.0
      %525 = vmatprep.subr.mxu0 0.0
      %526 = vmatpush1.msra.mxu0 0.0
      %527 = vmatprep.subr.mxu0 0.0
      %528 = vmatpush1.msra.mxu0 0.0
      %529 = vmatprep.subr.mxu0 0.0
      %530 = vmatpush1.msra.mxu0 0.0
      %531 = vmatprep.subr.mxu0 0.0
      %532 = vmatpush1.msra.mxu0 0.0
      %533 = vmatprep.mubr.f32.mxu0 0.0
      %534 = vmatmul.mubr.f32.gmra.mrb[0].mxu0 %v467
      %v535 = vpop.f32.mrb[0].mxu0
      %v536 = vadd.f32 %v465, %v535
      %v537 = vpop.f32.mrb[0].mxu0
      %538 = vdwg.mxu0
      %v539 = vxor.u32 %v536, 2147483648
      %v540 = vmul.f32 %v539, 1.442695
      %v541 = vpow.pop %v540
      %v542 = vadd.f32 %v541, 1.0
      %v543 = vrcp.pop %v542
      %v544 = vmul.f32 1.0, %v543
      %545 = vst [vmem:[%s247] sm:$0x1] %v544
      %p546 = scmp.lt.s32.totalorder %s17, 1
      %s547 = scalar_select %p546, %s17, 1
      %s548 = scalar_lea.vmem %s6, %s547
      // Predicated region
      $region45: #{isic_model1_forward.1} parent=43 // pred_check
        %p549 = pneg %p166
      $region46: #{isic_model1_forward.1} parent=43 // pred_check_branch
        %551 = sbr.rel (%p549) target = $region48
      $region47: #{isic_model1_forward.1} parent=43 // pred_region
        _
      $region48: #{isic_model1_forward.1} parent=43 // pred_fallthru
        _
    $region44: #{isic_model1_forward.1} parent=5 // pred_fallthru
      _
    %p552 = scmp.le.s32.totalorder 2, %s12
    // Predicated region
    $region49: #{isic_model1_forward.1} parent=5 // pred_check
      %p553 = pneg %p552
    $region50: #{isic_model1_forward.1} parent=5 // pred_check_branch
      %555 = sbr.rel (%p553) target = $region52
    $region51: #{isic_model1_forward.1} parent=5 // pred_region
      %s556 = ssub.s32 %s12, 2
      // Predicated region
      $region53: #{isic_model1_forward.1} parent=51 // pred_check
        %p557 = pneg %p172
      $region54: #{isic_model1_forward.1} parent=51 // pred_check_branch
        %559 = sbr.rel (%p557) target = $region56
      $region55: #{isic_model1_forward.1} parent=51 // pred_region
        %p560 = scmp.lt.s32.totalorder %s18, 1
        %s561 = scalar_select %p560, %s18, 1
        %s562 = scalar_lea.vmem %s6, %s561
      $region56: #{isic_model1_forward.1} parent=51 // pred_fallthru
        _
    $region52: #{isic_model1_forward.1} parent=5 // pred_fallthru
      _
  $region6: #{isic_model1_forward.1} parent=0 // loop_footer
    %s16 = sadd.s32 1, %s12
  $region7: #{isic_model1_forward.1} parent=0 // loop_footer_branch
    %11 = sbr.rel target = $region3
  $region8: #{isic_model1_forward.1} parent=0 // loop_exit
    _

</llo_original>
